<compile_context>
chip_gen: v5e
topology: v5e:2x2
jax: 0.10.0
libtpu: 0.0.40
codegen_flags: <defaults>
</compile_context>

<pallas_src>
import functools

import jax
import jax.numpy as jnp
from jax import lax
from jax.experimental import pallas as pl
from jax.experimental.pallas import tpu as pltpu

EPS = 1e-5  # float32 path of the torch LayerNorm


def _prenorm_conv_kernel(x_ref, g_ref, w_ref, b_ref, o_ref, *, matmul_dtype):
    # x_ref: (C, TL) block for one (batch, L-tile); channels on sublanes,
    #        sequence on lanes.
    x = x_ref[...].astype(jnp.float32)

    # --- LayerNorm over the channel axis (sublane reduction) ---
    mean = jnp.mean(x, axis=0, keepdims=True)                        # (1, TL)
    var = jnp.mean((x - mean) * (x - mean), axis=0, keepdims=True)   # unbiased=False
    xn = (x - mean) * lax.rsqrt(var + EPS) * g_ref[...]              # g: (C, 1)

    # --- fn: pointwise Conv1d(dim, dim, 1) ---
    # y[co, l] = sum_ci W[co, ci] * xn[ci, l]   (no transpose needed)
    y = lax.dot_general(
        w_ref[...], xn.astype(matmul_dtype),
        dimension_numbers=(((1,), (0,)), ((), ())),
        preferred_element_type=jnp.float32)                          # (C, TL)
    y = y + b_ref[...]                                               # b: (C, 1)
    o_ref[...] = y.astype(o_ref.dtype)


def _choose_block_l(L, C, target_rows=1024, max_tile_bytes=4 << 20):
    """Pick a lane-dense L tile (multiple of 128) that divides L and fits VMEM."""
    if L % 128 != 0:
        # Fall back to a single full-length block per batch element (legal
        # because block_shape == full array dim). Fine for small L; pad L
        # outside the kernel for huge non-128-multiple L.
        return L
    rows_budget = max(128, (max_tile_bytes // (C * 4)) // 128 * 128)
    tl = min(L, target_rows, rows_budget)
    tl = max(128, (tl // 128) * 128)
    while L % tl != 0:
        tl -= 128
    return tl


def prenorm_conv1x1(x_ncl, g, w, b, *, block_l=None, matmul_dtype=jnp.bfloat16):
    """Fused PreNorm(dim, Conv1d(dim, dim, 1)) forward.

    x_ncl: (B, C, L) float32 (PyTorch NCL layout)
    g:     (1, C, 1) LayerNorm scale
    w:     (C, C)    conv weight (out, in)
    b:     (C,)      conv bias
    returns (B, C, L)
    """
    B, C, L = x_ncl.shape
    tl = _choose_block_l(L, C) if block_l is None else block_l
    assert L % tl == 0, "block_l must divide L (pad L outside the kernel otherwise)"
    assert tl == L or tl % 128 == 0, "L tile must be lane-dense (x128) or full length"

    g2 = g.reshape(C, 1).astype(jnp.float32)
    b2 = b.reshape(C, 1).astype(jnp.float32)
    w2 = w.astype(matmul_dtype)       # weight downcast once in the wrapper

    grid = (B, L // tl)

    # VMEM budget: x/out tiles are double-buffered; weights are small.
    elt = x_ncl.dtype.itemsize
    tile_bytes = C * tl * elt
    vmem_need = 4 * tile_bytes + 2 * (C * C * w2.dtype.itemsize) + 8 * C * 4 + (1 << 20)
    vmem_limit = int(min(max(2 * vmem_need, 8 << 20), 64 << 20))

    cost = pl.CostEstimate(
        flops=2 * B * L * C * C,
        transcendentals=B * L,
        bytes_accessed=2 * B * C * L * elt + C * C * w2.dtype.itemsize)

    kernel = functools.partial(_prenorm_conv_kernel, matmul_dtype=matmul_dtype)

    return pl.pallas_call(
        kernel,
        out_shape=jax.ShapeDtypeStruct((B, C, L), x_ncl.dtype),
        grid_spec=pltpu.PrefetchScalarGridSpec(
            num_scalar_prefetch=0,
            grid=grid,
            in_specs=[
                pl.BlockSpec((pl.Squeezed(), C, tl), lambda bi, li: (bi, 0, li)),  # x
                pl.BlockSpec((C, 1), lambda bi, li: (0, 0)),                       # g
                pl.BlockSpec((C, C), lambda bi, li: (0, 0)),                       # W (out, in)
                pl.BlockSpec((C, 1), lambda bi, li: (0, 0)),                       # bias
            ],
            out_specs=pl.BlockSpec((pl.Squeezed(), C, tl), lambda bi, li: (bi, 0, li)),
        ),
        compiler_params=pltpu.CompilerParams(
            dimension_semantics=("parallel", "parallel"),
            vmem_limit_bytes=vmem_limit),
        cost_estimate=cost,
    )(x_ncl, g2, w2, b2)


def prenorm_conv1x1_reference(x_ncl, g, w, b):
    """Pure-JAX reference matching the PyTorch semantics exactly (f32)."""
    mean = jnp.mean(x_ncl, axis=1, keepdims=True)
    var = jnp.mean((x_ncl - mean) ** 2, axis=1, keepdims=True)
    xn = (x_ncl - mean) * lax.rsqrt(var + EPS) * g                   # (B, C, L)
    return jnp.einsum('oc,bcl->bol', w, xn) + b.reshape(1, -1, 1)


if __name__ == "__main__":
    # Small demo shapes; L = 3 lane-dense tiles of 128 -> grid (2, 3).
    B, dim, L = 2, 32, 384

    key = jax.random.PRNGKey(0)
    kx, kw, kb = jax.random.split(key, 3)

    x = jax.random.normal(kx, (B, dim, L), dtype=jnp.float32)        # NCL, like torch
    g = jnp.ones((1, dim, 1), dtype=jnp.float32)                     # LayerNorm.g init
    w = 0.05 * jax.random.normal(kw, (dim, dim), dtype=jnp.float32)  # Conv1d(dim,dim,1) weight
    b = 0.05 * jax.random.normal(kb, (dim,), dtype=jnp.float32)      # Conv1d bias

    ref = prenorm_conv1x1_reference(x, g, w, b)

    # f32 MXU operands: bit-exact-ish vs the reference.
    out_f32 = jax.block_until_ready(
        prenorm_conv1x1(x, g, w, b, block_l=128, matmul_dtype=jnp.float32))
    assert out_f32.shape == (B, dim, L)
    assert jnp.allclose(out_f32, ref, atol=1e-5, rtol=1e-5), "f32 mismatch vs reference"

    # bf16 MXU operands (default; preferred on v6e/v7x): looser tolerance.
    out_bf16 = jax.block_until_ready(
        prenorm_conv1x1(x, g, w, b, block_l=128, matmul_dtype=jnp.bfloat16))
    assert out_bf16.shape == (B, dim, L)
    assert jnp.allclose(out_bf16, ref, atol=5e-2, rtol=5e-2), "bf16 mismatch vs reference"

    print("KERNEL_OK")
</pallas_src>

<mosaic_0001>
module attributes {stable_mosaic.version = 11 : i64} {
  func.func @_prenorm_conv_kernel(%arg0: i32, %arg1: i32, %arg2: memref<1x32x128xf32, #tpu.memory_space<vmem>>, %arg3: memref<32x1xf32, #tpu.memory_space<vmem>>, %arg4: memref<32x32xf32, #tpu.memory_space<vmem>>, %arg5: memref<32x1xf32, #tpu.memory_space<vmem>>, %arg6: memref<1x32x128xf32, #tpu.memory_space<vmem>>) attributes {dimension_semantics = [#tpu.dimension_semantics<parallel>, #tpu.dimension_semantics<parallel>], iteration_bounds = array<i64: 2, 3>, scalar_prefetch = 0 : i64, scratch_operands = 0 : i64, tpu.core_type = #tpu.core_type<tc>, window_params = [{transform_indices = @transform_0, window_bounds = array<i64: 1, 32, 128>}, {pipeline_mode = #tpu.pipeline_mode<synchronous>, transform_indices = @transform_1, window_bounds = array<i64: 32, 1>}, {pipeline_mode = #tpu.pipeline_mode<synchronous>, transform_indices = @transform_2, window_bounds = array<i64: 32, 32>}, {pipeline_mode = #tpu.pipeline_mode<synchronous>, transform_indices = @transform_3, window_bounds = array<i64: 32, 1>}, {transform_indices = @transform_4, window_bounds = array<i64: 1, 32, 128>}]} {
    %c0 = arith.constant 0 : index
    %c0_0 = arith.constant 0 : index
    %c0_1 = arith.constant 0 : index
    %0 = vector.load %arg2[%c0, %c0_0, %c0_1] : memref<1x32x128xf32, #tpu.memory_space<vmem>>, vector<1x32x128xf32>
    %1 = vector.shape_cast %0 : vector<1x32x128xf32> to vector<32x128xf32>
    %cst = arith.constant dense<0.000000e+00> : vector<128xf32>
    %2 = vector.multi_reduction <add>, %1, %cst [0] : vector<32x128xf32> to vector<128xf32>
    %3 = vector.shape_cast %2 : vector<128xf32> to vector<1x128xf32>
    %cst_2 = arith.constant 3.200000e+01 : f32
    %4 = vector.broadcast %cst_2 : f32 to vector<1x128xf32>
    %5 = arith.divf %3, %4 : vector<1x128xf32>
    %6 = vector.broadcast %5 : vector<1x128xf32> to vector<32x128xf32>
    %7 = arith.subf %1, %6 : vector<32x128xf32>
    %8 = vector.broadcast %5 : vector<1x128xf32> to vector<32x128xf32>
    %9 = arith.subf %1, %8 : vector<32x128xf32>
    %10 = arith.mulf %7, %9 : vector<32x128xf32>
    %cst_3 = arith.constant dense<0.000000e+00> : vector<128xf32>
    %11 = vector.multi_reduction <add>, %10, %cst_3 [0] : vector<32x128xf32> to vector<128xf32>
    %12 = vector.shape_cast %11 : vector<128xf32> to vector<1x128xf32>
    %cst_4 = arith.constant 3.200000e+01 : f32
    %13 = vector.broadcast %cst_4 : f32 to vector<1x128xf32>
    %14 = arith.divf %12, %13 : vector<1x128xf32>
    %15 = vector.broadcast %5 : vector<1x128xf32> to vector<32x128xf32>
    %16 = arith.subf %1, %15 : vector<32x128xf32>
    %cst_5 = arith.constant 9.99999974E-6 : f32
    %17 = vector.broadcast %cst_5 : f32 to vector<1x128xf32>
    %18 = arith.addf %14, %17 : vector<1x128xf32>
    %19 = math.rsqrt %18 : vector<1x128xf32>
    %20 = vector.broadcast %19 : vector<1x128xf32> to vector<32x128xf32>
    %21 = arith.mulf %16, %20 : vector<32x128xf32>
    %c0_6 = arith.constant 0 : index
    %c0_7 = arith.constant 0 : index
    %22 = vector.load %arg3[%c0_6, %c0_7] : memref<32x1xf32, #tpu.memory_space<vmem>>, vector<32x1xf32>
    %23 = vector.broadcast %22 : vector<32x1xf32> to vector<32x128xf32>
    %24 = arith.mulf %21, %23 : vector<32x128xf32>
    %c0_8 = arith.constant 0 : index
    %c0_9 = arith.constant 0 : index
    %25 = vector.load %arg4[%c0_8, %c0_9] : memref<32x32xf32, #tpu.memory_space<vmem>>, vector<32x32xf32>
    %cst_10 = arith.constant dense<0.000000e+00> : vector<32x128xf32>
    %26 = tpu.matmul %25, %24, %cst_10 {dimension_numbers = #tpu.dot_dimension_numbers<[1], [0], [0], [1], [0, 0, 1, 1], [], []>} : vector<32x32xf32>, vector<32x128xf32>, vector<32x128xf32> -> vector<32x128xf32>
    %c0_11 = arith.constant 0 : index
    %c0_12 = arith.constant 0 : index
    %27 = vector.load %arg5[%c0_11, %c0_12] : memref<32x1xf32, #tpu.memory_space<vmem>>, vector<32x1xf32>
    %28 = vector.broadcast %27 : vector<32x1xf32> to vector<32x128xf32>
    %29 = arith.addf %26, %28 : vector<32x128xf32>
    %c0_13 = arith.constant 0 : index
    %c0_14 = arith.constant 0 : index
    %c0_15 = arith.constant 0 : index
    %30 = vector.load %arg6[%c0_13, %c0_14, %c0_15] : memref<1x32x128xf32, #tpu.memory_space<vmem>>, vector<1x32x128xf32>
    %31 = vector.shape_cast %30 : vector<1x32x128xf32> to vector<32x128xf32>
    %32 = vector.shape_cast %29 : vector<32x128xf32> to vector<1x32x128xf32>
    tpu.vector_store %arg6[%c0_13, %c0_14, %c0_15], %32 {strides = array<i32>} : memref<1x32x128xf32, #tpu.memory_space<vmem>>, vector<1x32x128xf32>,
    return
  }
  func.func @transform_0(%arg0: i32, %arg1: i32) -> (i32, i32, i32) {
    %c0_i32 = arith.constant 0 : i32
    %c0_i32_0 = arith.constant 0 : i32
    return %arg0, %c0_i32, %arg1 : i32, i32, i32
  }
  func.func @transform_1(%arg0: i32, %arg1: i32) -> (i32, i32) {
    %c0_i32 = arith.constant 0 : i32
    %c0_i32_0 = arith.constant 0 : i32
    %c0_i32_1 = arith.constant 0 : i32
    return %c0_i32, %c0_i32_0 : i32, i32
  }
  func.func @transform_2(%arg0: i32, %arg1: i32) -> (i32, i32) {
    %c0_i32 = arith.constant 0 : i32
    %c0_i32_0 = arith.constant 0 : i32
    %c0_i32_1 = arith.constant 0 : i32
    return %c0_i32, %c0_i32_0 : i32, i32
  }
  func.func @transform_3(%arg0: i32, %arg1: i32) -> (i32, i32) {
    %c0_i32 = arith.constant 0 : i32
    %c0_i32_0 = arith.constant 0 : i32
    %c0_i32_1 = arith.constant 0 : i32
    return %c0_i32, %c0_i32_0 : i32, i32
  }
  func.func @transform_4(%arg0: i32, %arg1: i32) -> (i32, i32, i32) {
    %c0_i32 = arith.constant 0 : i32
    %c0_i32_0 = arith.constant 0 : i32
    return %arg0, %c0_i32, %arg1 : i32, i32, i32
  }
}

</mosaic_0001>

<llo_original>
// kernel: tpu_custom_call.1
$region0: #{tpu_custom_call.1}
  #allocation0 [shape = 'u32[]', space=smem, size = 0x4, offset = 0x4, fixed_abs, tag = 'smem constant byte address 0x4 - core index']
  #allocation1 [shape = 'u32[72,128]{1,0:T(1,128)}', space=vmem, size = 0x9000, scoped, tag = 'internal scratch']
  %s0 = inlined_call_operand.hbm [shape: f32[2,32,384], index: 0, kind: input, shape index: {}]
  %s1 = inlined_call_operand.vmem [shape: f32[32,1], index: 1, kind: input, shape index: {}]
  %s2 = inlined_call_operand.vmem [shape: f32[32,32], index: 2, kind: input, shape index: {}]
  %s3 = inlined_call_operand.vmem [shape: f32[32,1], index: 3, kind: input, shape index: {}]
  %s4 = inlined_call_operand.hbm [shape: f32[2,32,384], index: 4, kind: output, shape index: {}]
  %s5 = sld [smem:[#allocation0]]
  $region53: #{tpu_custom_call.1} parent=0
    _
  %s7 = ssub.s32 1, %s5
  %s8 = scalar_select 0, %s7, %s5
  $region1: #{tpu_custom_call.1} parent=0
    #allocation2 [shape = 'u8[32768]{0}', space=vmem, size = 0x8000, scoped, tag = 'input window, operand 0']
    #allocation3 [shape = 's32[2]{0}', space=sflag, size = 0x8, scoped, tag = 'scoped memory for tpu_custom_call.1']
    #allocation4 [shape = 's32[2]{0}', space=sflag, size = 0x8, scoped, tag = 'scoped memory for tpu_custom_call.1']
    #allocation5 [shape = 'u8[32768]{0}', space=vmem, size = 0x8000, scoped, tag = 'output window, operand 0']
    %9 = vsyncpa [#allocation3], 0
    %s10 = scalar_lea.sflag [#allocation3], 1
    %11 = vsyncpa %s10, 0
    %12 = vsyncpa [#allocation4], 0
    %s13 = scalar_lea.sflag [#allocation4], 1
    %14 = vsyncpa %s13, 0
    loop: start=0, step=1, limit=8
    $region2: #{tpu_custom_call.1} parent=1 // loop_pre_header
      _
    $region3: #{tpu_custom_call.1} parent=1 // loop_header
      %s16 = sphi 0, %s20
      %p17 = scmp.ge.s32.totalorder %s16, 8
      %s23 = sphi 0, %s35
      %s24 = sphi 0, %s31
      %s25 = sphi 0, %s23
      %s26 = sphi 0, %s24
      %s27 = sphi 0, %s25
      %s28 = sphi 0, %s26
      %s40 = sphi 0, %s42
      %s43 = sphi 0, %s40
      %s44 = sphi 0, %s43
      %s60 = sphi 0, %s44
      %s64 = sphi 0, %s64
      %s66 = sphi 0, %s64
      %s67 = sphi 0, %s66
      %s81 = sphi 0, %s67
      %s85 = sphi 0, %s85
      %s87 = sphi 0, %s85
      %s88 = sphi 0, %s87
      %s102 = sphi 0, %s88
      %s106 = sphi 0, %s106
      %s108 = sphi 0, %s106
      %s109 = sphi 0, %s108
      %s123 = sphi 0, %s109
      %s131 = sphi 0, %s133
      %s134 = sphi 0, %s131
      %s135 = sphi 0, %s134
      %s151 = sphi 0, %s135
    $region4: #{tpu_custom_call.1} parent=1 // loop_header_branch
      %19 = sbr.rel (%p17) target = $region8
    $region5: #{tpu_custom_call.1} parent=1 // loop_body
      %s21 = ssub.s32 %s16, 1
      %s22 = ssub.s32 %s16, 2
      %s29 = sadd.s32 1, %s24
      %p30 = scmp.ge.s32.totalorder %s29, 3
      %s31 = scalar_select %p30, 0, %s29
      %s32 = sadd.s32 1, %s23
      %s33 = scalar_select %p30, %s32, %s23
      %p34 = scmp.ge.s32.totalorder %s33, 2
      %s35 = scalar_select %p34, 0, %s33
      %s36 = ssub.s32 %s23, %s35
      %s37 = ssub.s32 %s24, %s31
      %s38 = sor.u32 %s36, %s37
      %p39 = scmp.eq.s32.totalorder %s38, 0
      %s41 = sadd.s32 %s40, 1
      %s42 = scalar_select %p39, %s40, %s41
      %p45 = pneg %p39
      %p46 = scmp.eq.s32.totalorder %s16, 5
      %p47 = por %p45, %p46
      %p48 = scmp.ne.s32.totalorder %s40, %s43
      %p49 = scmp.eq.s32.totalorder %s16, 0
      %p50 = por %p48, %p49
      %p51 = scmp.ne.s32.totalorder %s40, %s43
      %p52 = scmp.eq.s32.totalorder %s21, 5
      %p53 = por %p51, %p52
      %p54 = scmp.ne.s32.totalorder %s43, %s44
      %p55 = scmp.eq.s32.totalorder %s21, 0
      %p56 = por %p54, %p55
      %p57 = scmp.ne.s32.totalorder %s43, %s44
      %p58 = scmp.eq.s32.totalorder %s22, 5
      %p59 = por %p57, %p58
      %p61 = scmp.ne.s32.totalorder %s44, %s60
      %p62 = scmp.eq.s32.totalorder %s22, 0
      %p63 = por %p61, %p62
      %s65 = sadd.s32 %s64, 1
      %p68 = scmp.eq.s32.totalorder %s16, 5
      %p69 = scmp.ne.s32.totalorder %s64, %s66
      %p70 = scmp.eq.s32.totalorder %s16, 0
      %p71 = por %p69, %p70
      %p72 = scmp.ne.s32.totalorder %s64, %s66
      %p73 = scmp.eq.s32.totalorder %s21, 5
      %p74 = por %p72, %p73
      %p75 = scmp.ne.s32.totalorder %s66, %s67
      %p76 = scmp.eq.s32.totalorder %s21, 0
      %p77 = por %p75, %p76
      %p78 = scmp.ne.s32.totalorder %s66, %s67
      %p79 = scmp.eq.s32.totalorder %s22, 5
      %p80 = por %p78, %p79
      %p82 = scmp.ne.s32.totalorder %s67, %s81
      %p83 = scmp.eq.s32.totalorder %s22, 0
      %p84 = por %p82, %p83
      %s86 = sadd.s32 %s85, 1
      %p89 = scmp.eq.s32.totalorder %s16, 5
      %p90 = scmp.ne.s32.totalorder %s85, %s87
      %p91 = scmp.eq.s32.totalorder %s16, 0
      %p92 = por %p90, %p91
      %p93 = scmp.ne.s32.totalorder %s85, %s87
      %p94 = scmp.eq.s32.totalorder %s21, 5
      %p95 = por %p93, %p94
      %p96 = scmp.ne.s32.totalorder %s87, %s88
      %p97 = scmp.eq.s32.totalorder %s21, 0
      %p98 = por %p96, %p97
      %p99 = scmp.ne.s32.totalorder %s87, %s88
      %p100 = scmp.eq.s32.totalorder %s22, 5
      %p101 = por %p99, %p100
      %p103 = scmp.ne.s32.totalorder %s88, %s102
      %p104 = scmp.eq.s32.totalorder %s22, 0
      %p105 = por %p103, %p104
      %s107 = sadd.s32 %s106, 1
      %p110 = scmp.eq.s32.totalorder %s16, 5
      %p111 = scmp.ne.s32.totalorder %s106, %s108
      %p112 = scmp.eq.s32.totalorder %s16, 0
      %p113 = por %p111, %p112
      %p114 = scmp.ne.s32.totalorder %s106, %s108
      %p115 = scmp.eq.s32.totalorder %s21, 5
      %p116 = por %p114, %p115
      %p117 = scmp.ne.s32.totalorder %s108, %s109
      %p118 = scmp.eq.s32.totalorder %s21, 0
      %p119 = por %p117, %p118
      %p120 = scmp.ne.s32.totalorder %s108, %s109
      %p121 = scmp.eq.s32.totalorder %s22, 5
      %p122 = por %p120, %p121
      %p124 = scmp.ne.s32.totalorder %s109, %s123
      %p125 = scmp.eq.s32.totalorder %s22, 0
      %p126 = por %p124, %p125
      %s127 = ssub.s32 %s23, %s35
      %s128 = ssub.s32 %s24, %s31
      %s129 = sor.u32 %s127, %s128
      %p130 = scmp.eq.s32.totalorder %s129, 0
      %s132 = sadd.s32 %s131, 1
      %s133 = scalar_select %p130, %s131, %s132
      %p136 = pneg %p130
      %p137 = scmp.eq.s32.totalorder %s16, 5
      %p138 = por %p136, %p137
      %p139 = scmp.ne.s32.totalorder %s131, %s134
      %p140 = scmp.eq.s32.totalorder %s16, 0
      %p141 = por %p139, %p140
      %p142 = scmp.ne.s32.totalorder %s131, %s134
      %p143 = scmp.eq.s32.totalorder %s21, 5
      %p144 = por %p142, %p143
      %p145 = scmp.ne.s32.totalorder %s134, %s135
      %p146 = scmp.eq.s32.totalorder %s21, 0
      %p147 = por %p145, %p146
      %p148 = scmp.ne.s32.totalorder %s134, %s135
      %p149 = scmp.eq.s32.totalorder %s22, 5
      %p150 = por %p148, %p149
      %p152 = scmp.ne.s32.totalorder %s135, %s151
      %p153 = scmp.eq.s32.totalorder %s22, 0
      %p154 = por %p152, %p153
      %p155 = scmp.le.s32.totalorder 1, %s16
      %p156 = scmp.lt.s32.totalorder %s16, 7
      %p157 = pnand %p155, %p156
      %p158 = pneg %p157
      // Predicated region
      $region9: #{tpu_custom_call.1} parent=5 // pred_check
        _
      $region10: #{tpu_custom_call.1} parent=5 // pred_check_branch
        %160 = sbr.rel (%p157) target = $region12
      $region11: #{tpu_custom_call.1} parent=5 // pred_region
        %s161 = ssub.s32 %s16, 1
        // Predicated region
        $region13: #{tpu_custom_call.1} parent=11 // pred_check
          %p162 = pneg %p77
        $region14: #{tpu_custom_call.1} parent=11 // pred_check_branch
          %164 = sbr.rel (%p162) target = $region16
        $region15: #{tpu_custom_call.1} parent=11 // pred_region
          _
        $region16: #{tpu_custom_call.1} parent=11 // pred_fallthru
          _
        // Predicated region
        $region17: #{tpu_custom_call.1} parent=11 // pred_check
          %p165 = pneg %p98
        $region18: #{tpu_custom_call.1} parent=11 // pred_check_branch
          %167 = sbr.rel (%p165) target = $region20
        $region19: #{tpu_custom_call.1} parent=11 // pred_region
          _
        $region20: #{tpu_custom_call.1} parent=11 // pred_fallthru
          _
        // Predicated region
        $region21: #{tpu_custom_call.1} parent=11 // pred_check
          %p168 = pneg %p119
        $region22: #{tpu_custom_call.1} parent=11 // pred_check_branch
          %170 = sbr.rel (%p168) target = $region24
        $region23: #{tpu_custom_call.1} parent=11 // pred_region
          _
        $region24: #{tpu_custom_call.1} parent=11 // pred_fallthru
          _
      $region12: #{tpu_custom_call.1} parent=5 // pred_fallthru
        _
      %p171 = scmp.lt.s32.totalorder %s16, 6
      // Predicated region
      $region25: #{tpu_custom_call.1} parent=5 // pred_check
        %p172 = pneg %p171
      $region26: #{tpu_custom_call.1} parent=5 // pred_check_branch
        %174 = sbr.rel (%p172) target = $region28
      $region27: #{tpu_custom_call.1} parent=5 // pred_region
        // Predicated region
        $region29: #{tpu_custom_call.1} parent=27 // pred_check
          %p175 = pneg %p50
        $region30: #{tpu_custom_call.1} parent=27 // pred_check_branch
          %177 = sbr.rel (%p175) target = $region32
        $region31: #{tpu_custom_call.1} parent=27 // pred_region
          %s178 = sand.u32 %s40, 1
          %s179 = scalar_lea.sflag [#allocation3], %s178
          %s180 = sand.u32 %s40, 1
          %s181 = smul.addr %s180, 32
          %s182 = scalar_lea.vmem [#allocation2], %s181
          %184 = vsyncadd %s179, 0
          %s185 = smul.addr %s23, 12
          %s186 = sadd.s32 %s24, %s185
          %s187 = smul.addr %s186, 8
          %s188 = scalar_lea.hbm %s0, %s187
          %s189 = sshll.u32 %s188, 4
          %s190 = int_to_ptr.hbm [resolvable:$true] %s189
          %s191 = sshll.u32 %s182, 4
          %s192 = int_to_ptr.vmem [resolvable:$true] %s191
          %197 = dma.hbm_to_vmem [thread:$0]  %s190, 512, %s192, %s179, 384, 128, 8
        $region32: #{tpu_custom_call.1} parent=27 // pred_fallthru
          _
      $region28: #{tpu_custom_call.1} parent=5 // pred_fallthru
        _
      %p198 = scmp.le.s32.totalorder 1, %s16
      %p199 = scmp.lt.s32.totalorder %s16, 7
      %p200 = pnand %p198, %p199
      %p201 = pneg %p200
      // Predicated region
      $region33: #{tpu_custom_call.1} parent=5 // pred_check
        _
      $region34: #{tpu_custom_call.1} parent=5 // pred_check_branch
        %203 = sbr.rel (%p200) target = $region36
      $region35: #{tpu_custom_call.1} parent=5 // pred_region
        %s204 = ssub.s32 %s16, 1
        %s205 = sand.u32 %s43, 1
        %s206 = scalar_lea.sflag [#allocation3], %s205
        %s207 = sand.u32 %s43, 1
        %s208 = smul.addr %s207, 32
        %s209 = scalar_lea.vmem [#allocation2], %s208
        // Predicated region
        $region37: #{tpu_custom_call.1} parent=35 // pred_check
          %p210 = pneg %p56
        $region38: #{tpu_custom_call.1} parent=35 // pred_check_branch
          %212 = sbr.rel (%p210) target = $region40
        $region39: #{tpu_custom_call.1} parent=35 // pred_region
          %214 = dma.done %s206, 512
        $region40: #{tpu_custom_call.1} parent=35 // pred_fallthru
          _
        %s215 = sand.u32 %s43, 1
        %s216 = scalar_lea.sflag [#allocation3], %s215
        %s217 = sand.u32 %s43, 1
        %s218 = smul.addr %s217, 32
        %s219 = scalar_lea.vmem [#allocation2], %s218
        %p220 = pneg %p56
        %p221 = pneg %p53
        %p222 = pneg %p77
        %p223 = pneg %p74
        %p224 = pneg %p98
        %p225 = pneg %p95
        %p226 = pneg %p119
        %p227 = pneg %p116
        %p228 = pneg %p147
        %p229 = pneg %p144
        %s230 = sand.u32 %s134, 1
        %s231 = scalar_lea.sflag [#allocation4], %s230
        %s232 = sand.u32 %s134, 1
        %s233 = smul.addr %s232, 32
        %s234 = scalar_lea.vmem [#allocation5], %s233
        %v235 = vld [vmem:[%s209] sm:$0xff]
        %v236 = vld [vmem:[%s209 + $0x8] sm:$0xff]
        %v237 = vld [vmem:[%s209 + $0x10] sm:$0xff]
        %v238 = vld [vmem:[%s209 + $0x18] sm:$0xff]
        %v239 = vadd.f32 %v235, %v236
        %v240 = vadd.f32 %v239, %v237
        %v241 = vadd.f32 %v240, %v238
        %v242 = vrot.slane %v241, 4
        %v243 = vadd.f32 %v241, %v242
        %v244 = vrot.slane %v243, 2
        %v245 = vadd.f32 %v243, %v244
        %v246 = vrot.slane %v245, 1
        %v247 = vadd.f32 %v245, %v246
        %v248 = vrcp.pop 32.0
        %v249 = vmul.f32 32.0, %v248
        %v250 = vsub.f32 1.0, %v249
        %v251 = vmul.f32 %v248, %v250
        %v252 = vadd.f32 %v248, %v251
        %vm253 = vweird.f32 %v248
        %v254 = vsel %vm253, %v248, %v252
        %v255 = vmul.f32 %v247, %v254
        %v256 = vsub.f32 %v235, %v255
        %v257 = vsub.f32 %v236, %v255
        %v258 = vsub.f32 %v237, %v255
        %v259 = vsub.f32 %v238, %v255
        %v260 = vmul.f32 %v256, %v256
        %v261 = vmul.f32 %v257, %v257
        %v262 = vmul.f32 %v258, %v258
        %v263 = vmul.f32 %v259, %v259
        %v264 = vadd.f32 %v260, %v261
        %v265 = vadd.f32 %v264, %v262
        %v266 = vadd.f32 %v265, %v263
        %v267 = vrot.slane %v266, 4
        %v268 = vadd.f32 %v266, %v267
        %v269 = vrot.slane %v268, 2
        %v270 = vadd.f32 %v268, %v269
        %v271 = vrot.slane %v270, 1
        %v272 = vadd.f32 %v270, %v271
        %v273 = vmul.f32 %v272, %v254
        %v274 = vadd.f32 %v273, 1e-05
        %v275 = vrsqrt.pop %v274
        %v276 = vmul.f32 %v275, %v274
        %v277 = vmul.f32 %v276, %v275
        %v278 = vmul.f32 0.5, %v277
        %v279 = vsub.f32 1.5, %v278
        %v280 = vmul.f32 %v275, %v279
        %vm281 = vweird.f32 %v274
        %vm282 = vweird.f32 %v275
        %vm283 = vmor %vm281, %vm282
        %v284 = vsel %vm283, %v275, %v280
        %v285 = vmul.f32 %v256, %v284
        %v286 = vmul.f32 %v257, %v284
        %v287 = vmul.f32 %v258, %v284
        %v288 = vmul.f32 %v259, %v284
        %v289 = vld [vmem:[%s1] sm:$0xff]
        %v290 = vld [vmem:[%s1 + $0x8] sm:$0xff]
        %v291 = vld [vmem:[%s1 + $0x10] sm:$0xff]
        %v292 = vld [vmem:[%s1 + $0x18] sm:$0xff]
        %294 = vset.pattern.permute.xlu0 0
        %295 = vperm.xlu0 %294, %v289
        %v296 = vpop.permute.xlu0 %295
        %299 = vset.pattern.permute.xlu0 0
        %300 = vperm.xlu0 %299, %v290
        %v301 = vpop.permute.xlu0 %300
        %304 = vset.pattern.permute.xlu0 0
        %305 = vperm.xlu0 %304, %v291
        %v306 = vpop.permute.xlu0 %305
        %309 = vset.pattern.permute.xlu0 0
        %310 = vperm.xlu0 %309, %v292
        %v311 = vpop.permute.xlu0 %310
        %v313 = vmul.f32 %v285, %v296
        %v314 = vmul.f32 %v286, %v301
        %v315 = vmul.f32 %v287, %v306
        %v316 = vmul.f32 %v288, %v311
        %v317 = vld [vmem:[%s2] sm:$0xff]
        %v318 = vld [vmem:[%s2 + $0x8] sm:$0xff]
        %v319 = vld [vmem:[%s2 + $0x10] sm:$0xff]
        %v320 = vld [vmem:[%s2 + $0x18] sm:$0xff]
        %v321 = vld [vmem:[%s3] sm:$0xff]
        %v322 = vld [vmem:[%s3 + $0x8] sm:$0xff]
        %v323 = vld [vmem:[%s3 + $0x10] sm:$0xff]
        %v324 = vld [vmem:[%s3 + $0x18] sm:$0xff]
        %326 = vset.pattern.permute.xlu0 0
        %327 = vperm.xlu0 %326, %v321
        %v328 = vpop.permute.xlu0 %327
        %331 = vset.pattern.permute.xlu0 0
        %332 = vperm.xlu0 %331, %v322
        %v333 = vpop.permute.xlu0 %332
        %336 = vset.pattern.permute.xlu0 0
        %337 = vperm.xlu0 %336, %v323
        %v338 = vpop.permute.xlu0 %337
        %341 = vset.pattern.permute.xlu0 0
        %342 = vperm.xlu0 %341, %v324
        %v343 = vpop.permute.xlu0 %342
        %vm345 = vcmask 261120
        %v347 = vsel %vm345, %v317, 0
        %v350 = vsel %vm345, %v318, 0
        %v353 = vsel %vm345, %v319, 0
        %v356 = vsel %vm345, %v320, 0
        %358 = vmatpush.msra.mxu0 0.0
        %359 = vmatpush.msra.mxu0 0.0
        %360 = vmatpush.msra.mxu0 0.0
        %361 = vmatpush.msra.mxu0 0.0
        %362 = vmatpush.msra.mxu0 0.0
        %363 = vmatpush.msra.mxu0 0.0
        %364 = vmatpush.msra.mxu0 0.0
        %365 = vmatpush.msra.mxu0 0.0
        %366 = vmatpush.msra.mxu0 0.0
        %367 = vmatpush.msra.mxu0 0.0
        %368 = vmatpush.msra.mxu0 0.0
        %369 = vmatpush.msra.mxu0 0.0
        %370 = vmatpush.msra.mxu0 %v316
        %371 = vmatpush.msra.mxu0 %v315
        %372 = vmatpush.msra.mxu0 %v314
        %373 = vmatpush.msra.mxu0 %v313
        %374 = vmatmul.f32.gmra.mxu0 %v347
        %v375 = vpop.f32.mrf.mxu0
        %v376 = vadd.f32 %v328, %v375
        %377 = vmatmul.f32.gmra.mxu0 %v350
        %v378 = vpop.f32.mrf.mxu0
        %v379 = vadd.f32 %v333, %v378
        %380 = vmatmul.f32.gmra.mxu0 %v353
        %v381 = vpop.f32.mrf.mxu0
        %v382 = vadd.f32 %v338, %v381
        %383 = vmatmul.f32.gmra.mxu0 %v356
        %v384 = vpop.f32.mrf.mxu0
        %v385 = vadd.f32 %v343, %v384
        %386 = vdwg.mxu0
        %387 = vst [vmem:[%s234] sm:$0xff] %v376
        %388 = vst [vmem:[%s234 + $0x8] sm:$0xff] %v379
        %389 = vst [vmem:[%s234 + $0x10] sm:$0xff] %v382
        %390 = vst [vmem:[%s234 + $0x18] sm:$0xff] %v385
        %s391 = sand.u32 %s134, 1
        %s392 = scalar_lea.sflag [#allocation4], %s391
        %s393 = sand.u32 %s134, 1
        %s394 = smul.addr %s393, 32
        %s395 = scalar_lea.vmem [#allocation5], %s394
        // Predicated region
        $region41: #{tpu_custom_call.1} parent=35 // pred_check
          %p396 = pneg %p144
        $region42: #{tpu_custom_call.1} parent=35 // pred_check_branch
          %398 = sbr.rel (%p396) target = $region44
        $region43: #{tpu_custom_call.1} parent=35 // pred_region
          %400 = vsyncadd %s392, 0
          %s401 = smul.addr %s25, 12
          %s402 = sadd.s32 %s26, %s401
          %s403 = smul.addr %s402, 8
          %s404 = scalar_lea.hbm %s4, %s403
          %s405 = sshll.u32 %s395, 4
          %s406 = int_to_ptr.vmem [resolvable:$true] %s405
          %s407 = sshll.u32 %s404, 4
          %s408 = int_to_ptr.hbm [resolvable:$true] %s407
          %413 = dma.vmem_to_hbm [thread:$0]  %s406, 512, %s408, %s392, 128, 384, 8
        $region44: #{tpu_custom_call.1} parent=35 // pred_fallthru
          _
      $region36: #{tpu_custom_call.1} parent=5 // pred_fallthru
        _
      %p414 = scmp.le.s32.totalorder 2, %s16
      // Predicated region
      $region45: #{tpu_custom_call.1} parent=5 // pred_check
        %p415 = pneg %p414
      $region46: #{tpu_custom_call.1} parent=5 // pred_check_branch
        %417 = sbr.rel (%p415) target = $region48
      $region47: #{tpu_custom_call.1} parent=5 // pred_region
        %s418 = ssub.s32 %s16, 2
        // Predicated region
        $region49: #{tpu_custom_call.1} parent=47 // pred_check
          %p419 = pneg %p150
        $region50: #{tpu_custom_call.1} parent=47 // pred_check_branch
          %421 = sbr.rel (%p419) target = $region52
        $region51: #{tpu_custom_call.1} parent=47 // pred_region
          %s422 = sand.u32 %s135, 1
          %s423 = scalar_lea.sflag [#allocation4], %s422
          %s424 = sand.u32 %s135, 1
          %s425 = smul.addr %s424, 32
          %s426 = scalar_lea.vmem [#allocation5], %s425
          %428 = dma.done %s423, 512
        $region52: #{tpu_custom_call.1} parent=47 // pred_fallthru
          _
      $region48: #{tpu_custom_call.1} parent=5 // pred_fallthru
        _
    $region6: #{tpu_custom_call.1} parent=1 // loop_footer
      %s20 = sadd.s32 1, %s16
    $region7: #{tpu_custom_call.1} parent=1 // loop_footer_branch
      %15 = sbr.rel target = $region3
    $region8: #{tpu_custom_call.1} parent=1 // loop_exit
      _
    %429 = vsyncpa [#allocation3], 1
    %s430 = scalar_lea.sflag [#allocation3], 1
    %431 = vsyncpa %s430, 1
    %432 = vsyncpa [#allocation4], 1
    %s433 = scalar_lea.sflag [#allocation4], 1
    %434 = vsyncpa %s433, 1

</llo_original>
